<compile_context>
chip_gen: v7x
topology: tpu7x:2x2x1
jax: 0.10.0
libtpu: 0.0.40
codegen_flags: <defaults>
</compile_context>

<pallas_src>
import jax
import jax.numpy as jnp
from jax.experimental import pallas as pl
from jax.experimental.pallas import tpu as pltpu

LANE = 128  # pad the hidden/lane dimension to this width


def _gru_seq_kernel(gi0_ref, h0_ref, wih_ref, whh_ref, bi_ref, bhn_ref,
                    out_ref, h_ref):
    """Whole-sequence multi-layer GRU in one kernel invocation.

    gi0_ref : (T, 1, 3Hp)  precomputed layer-0 input projection (x@W_ih0 + bias)
    h0_ref  : (L, 1, Hp)   initial hidden state
    wih_ref : (L, Hp, 3Hp) input->hidden weights, gate-major [r|z|n] (layer-0 slot unused)
    whh_ref : (L, Hp, 3Hp) hidden->hidden weights, gate-major [r|z|n]
    bi_ref  : (L, 1, 3Hp)  combined bias [b_ir+b_hr | b_iz+b_hz | b_in] (layer-0 slot unused)
    bhn_ref : (L, 1, Hp)   b_hn (added inside r * (...))
    out_ref : (T, 1, Hp)   top-layer output per token (VMEM resident, one dense writeback)
    h_ref   : (L, 1, Hp)   final hidden state
    """
    T = gi0_ref.shape[0]
    L, _, Hp = h_ref.shape

    h_ref[...] = h0_ref[...]

    @pl.loop(0, T)
    def _(t):
        gi = gi0_ref[t]                      # (1, 3Hp): hoisted layer-0 input projection
        x = None
        for layer in range(L):               # L is small & static -> unrolled
            h_prev = h_ref[layer]             # (1, Hp)
            if layer > 0:
                gi = jnp.dot(x, wih_ref[layer],
                             preferred_element_type=jnp.float32) + bi_ref[layer]
            gh = jnp.dot(h_prev, whh_ref[layer],
                         preferred_element_type=jnp.float32)
            # 128-aligned lane slices of the fused (1, 3Hp) gate vectors (free).
            r = jax.nn.sigmoid(gi[:, 0:Hp] + gh[:, 0:Hp])
            z = jax.nn.sigmoid(gi[:, Hp:2 * Hp] + gh[:, Hp:2 * Hp])
            n = jnp.tanh(gi[:, 2 * Hp:] + r * (gh[:, 2 * Hp:] + bhn_ref[layer]))
            h_new = (1.0 - z) * n + z * h_prev
            h_ref[layer] = h_new
            x = h_new                         # inter-layer dropout: identity (eval mode)
        out_ref[t] = x


def _gru_sequence_pallas(gi0, h0_p, w_ih_pk, w_hh_pk, b_i_pk, b_hn_pk):
    """Run the fused GRU over the whole (padded) sequence in one pallas_call."""
    T = gi0.shape[0]
    L, _, Hp = h0_p.shape
    H3 = 3 * Hp

    # Resident VMEM footprint (x2 for pipeline buffers) plus slack.
    n_elems = (gi0.size + h0_p.size + w_ih_pk.size + w_hh_pk.size
               + b_i_pk.size + b_hn_pk.size + T * Hp + L * Hp)
    vmem_bytes = max(int(2 * 4 * n_elems) + (4 << 20), 16 << 20)

    return pl.pallas_call(
        _gru_seq_kernel,
        out_shape=(
            jax.ShapeDtypeStruct((T, 1, Hp), jnp.float32),   # per-token top-layer output
            jax.ShapeDtypeStruct((L, 1, Hp), jnp.float32),   # final hidden state
        ),
        grid_spec=pltpu.PrefetchScalarGridSpec(
            num_scalar_prefetch=0,
            grid=(1,),                                       # time handled by pl.loop inside
            in_specs=[
                pl.BlockSpec((T, 1, H3), lambda i: (0, 0, 0)),   # precomputed gi0
                pl.BlockSpec((L, 1, Hp), lambda i: (0, 0, 0)),   # h0
                pl.BlockSpec((L, Hp, H3), lambda i: (0, 0, 0)),  # W_ih packed (resident)
                pl.BlockSpec((L, Hp, H3), lambda i: (0, 0, 0)),  # W_hh packed (resident)
                pl.BlockSpec((L, 1, H3), lambda i: (0, 0, 0)),   # combined bias
                pl.BlockSpec((L, 1, Hp), lambda i: (0, 0, 0)),   # b_hn
            ],
            out_specs=(
                pl.BlockSpec((T, 1, Hp), lambda i: (0, 0, 0)),   # outputs (dense writeback)
                pl.BlockSpec((L, 1, Hp), lambda i: (0, 0, 0)),   # final hidden
            ),
        ),
        compiler_params=pltpu.CompilerParams(
            dimension_semantics=("arbitrary",),
            vmem_limit_bytes=vmem_bytes,
        ),
    )(gi0, h0_p, w_ih_pk, w_hh_pk, b_i_pk, b_hn_pk)


@jax.jit
def _encoder_run(emb_table_p, tokens, hidden, w_ih_pk, w_hh_pk, b_i_pk, b_hn_pk):
    """Gather embeddings, hoist the layer-0 projection, run the fused kernel, unpad."""
    T = tokens.shape[0]
    Hp = emb_table_p.shape[1]
    L, _, H = hidden.shape

    x_emb = emb_table_p[tokens]                                   # (T, Hp): one gather
    # TODO(synk): training-mode dropout on x_emb would go here (identity in eval mode).
    gi0 = (x_emb @ w_ih_pk[0] + b_i_pk[0]).reshape(T, 1, 3 * Hp)  # hoisted layer-0 matmul
    h0_p = jnp.pad(hidden, ((0, 0), (0, 0), (0, Hp - H)))

    outs_p, new_h_p = _gru_sequence_pallas(gi0, h0_p, w_ih_pk, w_hh_pk,
                                           b_i_pk, b_hn_pk)
    return outs_p[:, 0, :H], new_h_p[:, :, :H]                    # (T, H), (L, 1, H)


class EncoderRNNPallas:
    """JAX/Pallas port of the PyTorch EncoderRNN (GRU variant), eval mode."""

    def __init__(self, input_size, hidden_size, hidden_layers, dropout, key):
        self.hidden_size = hidden_size
        self.hidden_layers = hidden_layers
        self.dropout_prob = dropout  # identity in eval mode
        Hp = ((hidden_size + LANE - 1) // LANE) * LANE
        self.padded_size = Hp

        k_emb, k_wih, k_whh, k_bih, k_bhh = jax.random.split(key, 5)
        L, H = hidden_layers, hidden_size

        # nn.Embedding init ~ N(0, 1); columns beyond H are zero-padded.
        emb = jax.random.normal(k_emb, (input_size, H), jnp.float32)
        self.embedding = emb
        self.embedding_p = jnp.pad(emb, ((0, 0), (0, Hp - H)))

        # nn.GRU init ~ U(-1/sqrt(H), 1/sqrt(H)); gate order [r|z|n], pre-transposed
        # so all matmuls compute x @ W.  Padded rows/cols/lanes are zero, so padded
        # lanes of the hidden state stay exactly 0 through the recurrence.
        bound = 1.0 / float(H) ** 0.5
        w_ih = jax.random.uniform(k_wih, (L, 3, H, H), jnp.float32, -bound, bound)
        w_hh = jax.random.uniform(k_whh, (L, 3, H, H), jnp.float32, -bound, bound)
        b_ih = jax.random.uniform(k_bih, (L, 3, 1, H), jnp.float32, -bound, bound)
        b_hh = jax.random.uniform(k_bhh, (L, 3, 1, H), jnp.float32, -bound, bound)
        self.w_ih, self.w_hh, self.b_ih, self.b_hh = w_ih, w_hh, b_ih, b_hh  # for reference

        w_ih_p = jnp.pad(w_ih, ((0, 0), (0, 0), (0, Hp - H), (0, Hp - H)))
        w_hh_p = jnp.pad(w_hh, ((0, 0), (0, 0), (0, Hp - H), (0, Hp - H)))
        b_ih_p = jnp.pad(b_ih, ((0, 0), (0, 0), (0, 0), (0, Hp - H)))
        b_hh_p = jnp.pad(b_hh, ((0, 0), (0, 0), (0, 0), (0, Hp - H)))

        # Pack gate-major -> (L, Hp, 3Hp): lane block g holds gate g (r=0, z=1, n=2).
        self.w_ih_pk = jnp.transpose(w_ih_p, (0, 2, 1, 3)).reshape(L, Hp, 3 * Hp)
        self.w_hh_pk = jnp.transpose(w_hh_p, (0, 2, 1, 3)).reshape(L, Hp, 3 * Hp)
        # Combined bias [b_ir+b_hr | b_iz+b_hz | b_in]; b_hn kept separate since it
        # is inside r * (h @ W_hn + b_hn).
        b_hh_rz = b_hh_p.at[:, 2].set(0.0)
        self.b_i_pk = jnp.transpose(b_ih_p + b_hh_rz, (0, 2, 1, 3)).reshape(L, 1, 3 * Hp)
        self.b_hn_pk = b_hh_p[:, 2]                                  # (L, 1, Hp)

    def init_hidden(self):
        return jnp.zeros((self.hidden_layers, 1, self.hidden_size), jnp.float32)

    def __call__(self, token, hidden):
        """forward(): one token (seq_len=1, batch=1) -> (output (1,1,H), hidden (L,1,H))."""
        tokens = jnp.asarray(token, jnp.int32).reshape(1)
        outs, new_h = _encoder_run(self.embedding_p, tokens, hidden,
                                   self.w_ih_pk, self.w_hh_pk,
                                   self.b_i_pk, self.b_hn_pk)
        return outs.reshape(1, 1, self.hidden_size), new_h

    def encode(self, input_tokens):
        """encode(): whole sequence fused into a single pallas_call."""
        tokens = jnp.asarray(input_tokens, jnp.int32)
        outs, new_h = _encoder_run(self.embedding_p, tokens, self.init_hidden(),
                                   self.w_ih_pk, self.w_hh_pk,
                                   self.b_i_pk, self.b_hn_pk)
        return outs, new_h   # (T, H), (L, 1, H)


def _reference_encode(emb, tokens, h0, w_ih, w_hh, b_ih, b_hh):
    """Pure-JAX (unpadded) reference matching PyTorch nn.GRU semantics."""
    L, _, H = h0.shape
    h = [h0[l] for l in range(L)]
    outs = []
    for t in range(tokens.shape[0]):
        inp = emb[tokens[t]].reshape(1, H)
        for l in range(L):
            h_prev = h[l]
            gi_r = inp @ w_ih[l, 0] + b_ih[l, 0]
            gh_r = h_prev @ w_hh[l, 0] + b_hh[l, 0]
            gi_z = inp @ w_ih[l, 1] + b_ih[l, 1]
            gh_z = h_prev @ w_hh[l, 1] + b_hh[l, 1]
            gi_n = inp @ w_ih[l, 2] + b_ih[l, 2]
            gh_n = h_prev @ w_hh[l, 2] + b_hh[l, 2]
            r = jax.nn.sigmoid(gi_r + gh_r)
            z = jax.nn.sigmoid(gi_z + gh_z)
            n = jnp.tanh(gi_n + r * gh_n)
            h_new = (1.0 - z) * n + z * h_prev
            h[l] = h_new
            inp = h_new
        outs.append(inp[0])
    return jnp.stack(outs), jnp.stack(h)


if __name__ == "__main__":
    INPUT_SIZE = 50      # vocab size
    HIDDEN_SIZE = 32
    HIDDEN_LAYERS = 2
    DROPOUT = 0.1
    SEQ_LEN = 8

    key = jax.random.PRNGKey(0)
    enc = EncoderRNNPallas(INPUT_SIZE, HIDDEN_SIZE, HIDDEN_LAYERS, DROPOUT, key)

    tokens = jax.random.randint(jax.random.PRNGKey(1), (SEQ_LEN,), 0, INPUT_SIZE)

    # Single forward step (forward() semantics) — same fused kernel with T=1.
    hidden0 = enc.init_hidden()
    out, hidden1 = enc(tokens[0], hidden0)
    jax.block_until_ready((out, hidden1))
    assert out.shape == (1, 1, HIDDEN_SIZE)
    assert hidden1.shape == (HIDDEN_LAYERS, 1, HIDDEN_SIZE)

    # Fused encode over the whole sequence (one pallas_call, one in-kernel time loop).
    enc_outputs, enc_hidden = enc.encode(tokens)
    jax.block_until_ready((enc_outputs, enc_hidden))
    assert enc_outputs.shape == (SEQ_LEN, HIDDEN_SIZE)
    assert enc_hidden.shape == (HIDDEN_LAYERS, 1, HIDDEN_SIZE)

    # Check against pure-JAX reference (unpadded, un-fused weights).
    ref_outs, ref_h = _reference_encode(enc.embedding, tokens, hidden0,
                                        enc.w_ih, enc.w_hh, enc.b_ih, enc.b_hh)
    assert jnp.allclose(enc_outputs, ref_outs, atol=1e-4), "encode outputs mismatch"
    assert jnp.allclose(enc_hidden, ref_h, atol=1e-4), "encode hidden mismatch"
    assert jnp.allclose(out[0, 0], ref_outs[0], atol=1e-4), "forward output mismatch"

    print("KERNEL_OK")
</pallas_src>

<mosaic_0001>
module attributes {stable_mosaic.version = 11 : i64} {
  func.func @_gru_seq_kernel(%arg0: i32, %arg1: memref<1x1x384xf32, #tpu.memory_space<vmem>>, %arg2: memref<2x1x128xf32, #tpu.memory_space<vmem>>, %arg3: memref<2x128x384xf32, #tpu.memory_space<vmem>>, %arg4: memref<2x128x384xf32, #tpu.memory_space<vmem>>, %arg5: memref<2x1x384xf32, #tpu.memory_space<vmem>>, %arg6: memref<2x1x128xf32, #tpu.memory_space<vmem>>, %arg7: memref<1x1x128xf32, #tpu.memory_space<vmem>>, %arg8: memref<2x1x128xf32, #tpu.memory_space<vmem>>) attributes {dimension_semantics = [#tpu.dimension_semantics<arbitrary>], iteration_bounds = array<i64: 1>, scalar_prefetch = 0 : i64, scratch_operands = 0 : i64, tpu.core_type = #tpu.core_type<tc>, window_params = [{pipeline_mode = #tpu.pipeline_mode<synchronous>, transform_indices = @transform_0, window_bounds = array<i64: 1, 1, 384>}, {pipeline_mode = #tpu.pipeline_mode<synchronous>, transform_indices = @transform_1, window_bounds = array<i64: 2, 1, 128>}, {pipeline_mode = #tpu.pipeline_mode<synchronous>, transform_indices = @transform_2, window_bounds = array<i64: 2, 128, 384>}, {pipeline_mode = #tpu.pipeline_mode<synchronous>, transform_indices = @transform_3, window_bounds = array<i64: 2, 128, 384>}, {pipeline_mode = #tpu.pipeline_mode<synchronous>, transform_indices = @transform_4, window_bounds = array<i64: 2, 1, 384>}, {pipeline_mode = #tpu.pipeline_mode<synchronous>, transform_indices = @transform_5, window_bounds = array<i64: 2, 1, 128>}, {pipeline_mode = #tpu.pipeline_mode<synchronous>, transform_indices = @transform_6, window_bounds = array<i64: 1, 1, 128>}, {pipeline_mode = #tpu.pipeline_mode<synchronous>, transform_indices = @transform_7, window_bounds = array<i64: 2, 1, 128>}]} {
    %c0 = arith.constant 0 : index
    %c0_0 = arith.constant 0 : index
    %c0_1 = arith.constant 0 : index
    %0 = vector.load %arg2[%c0, %c0_0, %c0_1] : memref<2x1x128xf32, #tpu.memory_space<vmem>>, vector<2x1x128xf32>
    %c0_2 = arith.constant 0 : index
    %c0_3 = arith.constant 0 : index
    %c0_4 = arith.constant 0 : index
    %1 = vector.load %arg8[%c0_2, %c0_3, %c0_4] : memref<2x1x128xf32, #tpu.memory_space<vmem>>, vector<2x1x128xf32>
    tpu.vector_store %arg8[%c0_2, %c0_3, %c0_4], %0 {strides = array<i32>} : memref<2x1x128xf32, #tpu.memory_space<vmem>>, vector<2x1x128xf32>,
    %c0_i32 = arith.constant 0 : i32
    %c1_i32 = arith.constant 1 : i32
    %2 = arith.muli %c0_i32, %c1_i32 : i32
    %c0_i32_5 = arith.constant 0 : i32
    %3 = arith.addi %c0_i32_5, %2 : i32
    %4 = arith.index_cast %3 : i32 to index
    %c0_6 = arith.constant 0 : index
    %c0_7 = arith.constant 0 : index
    %5 = vector.load %arg1[%4, %c0_6, %c0_7] : memref<1x1x384xf32, #tpu.memory_space<vmem>>, vector<1x1x384xf32>
    %6 = vector.shape_cast %5 : vector<1x1x384xf32> to vector<1x384xf32>
    %c0_8 = arith.constant 0 : index
    %c0_9 = arith.constant 0 : index
    %c0_10 = arith.constant 0 : index
    %7 = vector.load %arg8[%c0_8, %c0_9, %c0_10] : memref<2x1x128xf32, #tpu.memory_space<vmem>>, vector<1x1x128xf32>
    %8 = vector.shape_cast %7 : vector<1x1x128xf32> to vector<1x128xf32>
    %c0_11 = arith.constant 0 : index
    %c0_12 = arith.constant 0 : index
    %c0_13 = arith.constant 0 : index
    %9 = vector.load %arg4[%c0_11, %c0_12, %c0_13] : memref<2x128x384xf32, #tpu.memory_space<vmem>>, vector<1x128x384xf32>
    %10 = vector.shape_cast %9 : vector<1x128x384xf32> to vector<128x384xf32>
    %cst = arith.constant dense<0.000000e+00> : vector<1x384xf32>
    %11 = tpu.matmul %8, %10, %cst {dimension_numbers = #tpu.dot_dimension_numbers<[1], [0], [0], [1], [0, 0, 1, 1], [], []>} : vector<1x128xf32>, vector<128x384xf32>, vector<1x384xf32> -> vector<1x384xf32>
    %12 = vector.extract_strided_slice %6 {offsets = [0, 0], sizes = [1, 128], strides = [1, 1]} : vector<1x384xf32> to vector<1x128xf32>
    %13 = vector.extract_strided_slice %11 {offsets = [0, 0], sizes = [1, 128], strides = [1, 1]} : vector<1x384xf32> to vector<1x128xf32>
    %14 = arith.addf %12, %13 : vector<1x128xf32>
    %15 = arith.negf %14 : vector<1x128xf32>
    %16 = math.exp %15 : vector<1x128xf32>
    %cst_14 = arith.constant 1.000000e+00 : f32
    %17 = vector.broadcast %cst_14 : f32 to vector<1x128xf32>
    %18 = arith.addf %17, %16 : vector<1x128xf32>
    %19 = arith.divf %17, %18 : vector<1x128xf32>
    %20 = vector.extract_strided_slice %6 {offsets = [0, 128], sizes = [1, 128], strides = [1, 1]} : vector<1x384xf32> to vector<1x128xf32>
    %21 = vector.extract_strided_slice %11 {offsets = [0, 128], sizes = [1, 128], strides = [1, 1]} : vector<1x384xf32> to vector<1x128xf32>
    %22 = arith.addf %20, %21 : vector<1x128xf32>
    %23 = arith.negf %22 : vector<1x128xf32>
    %24 = math.exp %23 : vector<1x128xf32>
    %cst_15 = arith.constant 1.000000e+00 : f32
    %25 = vector.broadcast %cst_15 : f32 to vector<1x128xf32>
    %26 = arith.addf %25, %24 : vector<1x128xf32>
    %27 = arith.divf %25, %26 : vector<1x128xf32>
    %28 = vector.extract_strided_slice %6 {offsets = [0, 256], sizes = [1, 128], strides = [1, 1]} : vector<1x384xf32> to vector<1x128xf32>
    %29 = vector.extract_strided_slice %11 {offsets = [0, 256], sizes = [1, 128], strides = [1, 1]} : vector<1x384xf32> to vector<1x128xf32>
    %c0_16 = arith.constant 0 : index
    %c0_17 = arith.constant 0 : index
    %c0_18 = arith.constant 0 : index
    %30 = vector.load %arg6[%c0_16, %c0_17, %c0_18] : memref<2x1x128xf32, #tpu.memory_space<vmem>>, vector<1x1x128xf32>
    %31 = vector.shape_cast %30 : vector<1x1x128xf32> to vector<1x128xf32>
    %32 = arith.addf %29, %31 : vector<1x128xf32>
    %33 = arith.mulf %19, %32 : vector<1x128xf32>
    %34 = arith.addf %28, %33 : vector<1x128xf32>
    %35 = math.tanh %34 : vector<1x128xf32>
    %cst_19 = arith.constant 1.000000e+00 : f32
    %36 = vector.broadcast %cst_19 : f32 to vector<1x128xf32>
    %37 = arith.subf %36, %27 : vector<1x128xf32>
    %38 = arith.mulf %37, %35 : vector<1x128xf32>
    %39 = arith.mulf %27, %8 : vector<1x128xf32>
    %40 = arith.addf %38, %39 : vector<1x128xf32>
    %c0_20 = arith.constant 0 : index
    %c0_21 = arith.constant 0 : index
    %c0_22 = arith.constant 0 : index
    %41 = vector.load %arg8[%c0_20, %c0_21, %c0_22] : memref<2x1x128xf32, #tpu.memory_space<vmem>>, vector<1x1x128xf32>
    %42 = vector.shape_cast %41 : vector<1x1x128xf32> to vector<1x128xf32>
    %43 = vector.shape_cast %40 : vector<1x128xf32> to vector<1x1x128xf32>
    tpu.vector_store %arg8[%c0_20, %c0_21, %c0_22], %43 {strides = array<i32>} : memref<2x1x128xf32, #tpu.memory_space<vmem>>, vector<1x1x128xf32>,
    %c1 = arith.constant 1 : index
    %c0_23 = arith.constant 0 : index
    %c0_24 = arith.constant 0 : index
    %44 = vector.load %arg8[%c1, %c0_23, %c0_24] : memref<2x1x128xf32, #tpu.memory_space<vmem>>, vector<1x1x128xf32>
    %45 = vector.shape_cast %44 : vector<1x1x128xf32> to vector<1x128xf32>
    %c1_25 = arith.constant 1 : index
    %c0_26 = arith.constant 0 : index
    %c0_27 = arith.constant 0 : index
    %46 = vector.load %arg3[%c1_25, %c0_26, %c0_27] : memref<2x128x384xf32, #tpu.memory_space<vmem>>, vector<1x128x384xf32>
    %47 = vector.shape_cast %46 : vector<1x128x384xf32> to vector<128x384xf32>
    %cst_28 = arith.constant dense<0.000000e+00> : vector<1x384xf32>
    %48 = tpu.matmul %40, %47, %cst_28 {dimension_numbers = #tpu.dot_dimension_numbers<[1], [0], [0], [1], [0, 0, 1, 1], [], []>} : vector<1x128xf32>, vector<128x384xf32>, vector<1x384xf32> -> vector<1x384xf32>
    %c1_29 = arith.constant 1 : index
    %c0_30 = arith.constant 0 : index
    %c0_31 = arith.constant 0 : index
    %49 = vector.load %arg5[%c1_29, %c0_30, %c0_31] : memref<2x1x384xf32, #tpu.memory_space<vmem>>, vector<1x1x384xf32>
    %50 = vector.shape_cast %49 : vector<1x1x384xf32> to vector<1x384xf32>
    %51 = arith.addf %48, %50 : vector<1x384xf32>
    %c1_32 = arith.constant 1 : index
    %c0_33 = arith.constant 0 : index
    %c0_34 = arith.constant 0 : index
    %52 = vector.load %arg4[%c1_32, %c0_33, %c0_34] : memref<2x128x384xf32, #tpu.memory_space<vmem>>, vector<1x128x384xf32>
    %53 = vector.shape_cast %52 : vector<1x128x384xf32> to vector<128x384xf32>
    %cst_35 = arith.constant dense<0.000000e+00> : vector<1x384xf32>
    %54 = tpu.matmul %45, %53, %cst_35 {dimension_numbers = #tpu.dot_dimension_numbers<[1], [0], [0], [1], [0, 0, 1, 1], [], []>} : vector<1x128xf32>, vector<128x384xf32>, vector<1x384xf32> -> vector<1x384xf32>
    %55 = vector.extract_strided_slice %51 {offsets = [0, 0], sizes = [1, 128], strides = [1, 1]} : vector<1x384xf32> to vector<1x128xf32>
    %56 = vector.extract_strided_slice %54 {offsets = [0, 0], sizes = [1, 128], strides = [1, 1]} : vector<1x384xf32> to vector<1x128xf32>
    %57 = arith.addf %55, %56 : vector<1x128xf32>
    %58 = arith.negf %57 : vector<1x128xf32>
    %59 = math.exp %58 : vector<1x128xf32>
    %cst_36 = arith.constant 1.000000e+00 : f32
    %60 = vector.broadcast %cst_36 : f32 to vector<1x128xf32>
    %61 = arith.addf %60, %59 : vector<1x128xf32>
    %62 = arith.divf %60, %61 : vector<1x128xf32>
    %63 = vector.extract_strided_slice %51 {offsets = [0, 128], sizes = [1, 128], strides = [1, 1]} : vector<1x384xf32> to vector<1x128xf32>
    %64 = vector.extract_strided_slice %54 {offsets = [0, 128], sizes = [1, 128], strides = [1, 1]} : vector<1x384xf32> to vector<1x128xf32>
    %65 = arith.addf %63, %64 : vector<1x128xf32>
    %66 = arith.negf %65 : vector<1x128xf32>
    %67 = math.exp %66 : vector<1x128xf32>
    %cst_37 = arith.constant 1.000000e+00 : f32
    %68 = vector.broadcast %cst_37 : f32 to vector<1x128xf32>
    %69 = arith.addf %68, %67 : vector<1x128xf32>
    %70 = arith.divf %68, %69 : vector<1x128xf32>
    %71 = vector.extract_strided_slice %51 {offsets = [0, 256], sizes = [1, 128], strides = [1, 1]} : vector<1x384xf32> to vector<1x128xf32>
    %72 = vector.extract_strided_slice %54 {offsets = [0, 256], sizes = [1, 128], strides = [1, 1]} : vector<1x384xf32> to vector<1x128xf32>
    %c1_38 = arith.constant 1 : index
    %c0_39 = arith.constant 0 : index
    %c0_40 = arith.constant 0 : index
    %73 = vector.load %arg6[%c1_38, %c0_39, %c0_40] : memref<2x1x128xf32, #tpu.memory_space<vmem>>, vector<1x1x128xf32>
    %74 = vector.shape_cast %73 : vector<1x1x128xf32> to vector<1x128xf32>
    %75 = arith.addf %72, %74 : vector<1x128xf32>
    %76 = arith.mulf %62, %75 : vector<1x128xf32>
    %77 = arith.addf %71, %76 : vector<1x128xf32>
    %78 = math.tanh %77 : vector<1x128xf32>
    %cst_41 = arith.constant 1.000000e+00 : f32
    %79 = vector.broadcast %cst_41 : f32 to vector<1x128xf32>
    %80 = arith.subf %79, %70 : vector<1x128xf32>
    %81 = arith.mulf %80, %78 : vector<1x128xf32>
    %82 = arith.mulf %70, %45 : vector<1x128xf32>
    %83 = arith.addf %81, %82 : vector<1x128xf32>
    %c1_42 = arith.constant 1 : index
    %c0_43 = arith.constant 0 : index
    %c0_44 = arith.constant 0 : index
    %84 = vector.load %arg8[%c1_42, %c0_43, %c0_44] : memref<2x1x128xf32, #tpu.memory_space<vmem>>, vector<1x1x128xf32>
    %85 = vector.shape_cast %84 : vector<1x1x128xf32> to vector<1x128xf32>
    %86 = vector.shape_cast %83 : vector<1x128xf32> to vector<1x1x128xf32>
    tpu.vector_store %arg8[%c1_42, %c0_43, %c0_44], %86 {strides = array<i32>} : memref<2x1x128xf32, #tpu.memory_space<vmem>>, vector<1x1x128xf32>,
    %87 = arith.index_cast %3 : i32 to index
    %c0_45 = arith.constant 0 : index
    %c0_46 = arith.constant 0 : index
    %88 = vector.load %arg7[%87, %c0_45, %c0_46] : memref<1x1x128xf32, #tpu.memory_space<vmem>>, vector<1x1x128xf32>
    %89 = vector.shape_cast %88 : vector<1x1x128xf32> to vector<1x128xf32>
    %90 = vector.shape_cast %83 : vector<1x128xf32> to vector<1x1x128xf32>
    tpu.vector_store %arg7[%87, %c0_45, %c0_46], %90 {strides = array<i32>} : memref<1x1x128xf32, #tpu.memory_space<vmem>>, vector<1x1x128xf32>,
    %c1_i32_47 = arith.constant 1 : i32
    return
  }
  func.func @transform_0(%arg0: i32) -> (i32, i32, i32) {
    %c0_i32 = arith.constant 0 : i32
    %c0_i32_0 = arith.constant 0 : i32
    %c0_i32_1 = arith.constant 0 : i32
    %c0_i32_2 = arith.constant 0 : i32
    return %c0_i32, %c0_i32_0, %c0_i32_1 : i32, i32, i32
  }
  func.func @transform_1(%arg0: i32) -> (i32, i32, i32) {
    %c0_i32 = arith.constant 0 : i32
    %c0_i32_0 = arith.constant 0 : i32
    %c0_i32_1 = arith.constant 0 : i32
    %c0_i32_2 = arith.constant 0 : i32
    return %c0_i32, %c0_i32_0, %c0_i32_1 : i32, i32, i32
  }
  func.func @transform_2(%arg0: i32) -> (i32, i32, i32) {
    %c0_i32 = arith.constant 0 : i32
    %c0_i32_0 = arith.constant 0 : i32
    %c0_i32_1 = arith.constant 0 : i32
    %c0_i32_2 = arith.constant 0 : i32
    return %c0_i32, %c0_i32_0, %c0_i32_1 : i32, i32, i32
  }
  func.func @transform_3(%arg0: i32) -> (i32, i32, i32) {
    %c0_i32 = arith.constant 0 : i32
    %c0_i32_0 = arith.constant 0 : i32
    %c0_i32_1 = arith.constant 0 : i32
    %c0_i32_2 = arith.constant 0 : i32
    return %c0_i32, %c0_i32_0, %c0_i32_1 : i32, i32, i32
  }
  func.func @transform_4(%arg0: i32) -> (i32, i32, i32) {
    %c0_i32 = arith.constant 0 : i32
    %c0_i32_0 = arith.constant 0 : i32
    %c0_i32_1 = arith.constant 0 : i32
    %c0_i32_2 = arith.constant 0 : i32
    return %c0_i32, %c0_i32_0, %c0_i32_1 : i32, i32, i32
  }
  func.func @transform_5(%arg0: i32) -> (i32, i32, i32) {
    %c0_i32 = arith.constant 0 : i32
    %c0_i32_0 = arith.constant 0 : i32
    %c0_i32_1 = arith.constant 0 : i32
    %c0_i32_2 = arith.constant 0 : i32
    return %c0_i32, %c0_i32_0, %c0_i32_1 : i32, i32, i32
  }
  func.func @transform_6(%arg0: i32) -> (i32, i32, i32) {
    %c0_i32 = arith.constant 0 : i32
    %c0_i32_0 = arith.constant 0 : i32
    %c0_i32_1 = arith.constant 0 : i32
    %c0_i32_2 = arith.constant 0 : i32
    return %c0_i32, %c0_i32_0, %c0_i32_1 : i32, i32, i32
  }
  func.func @transform_7(%arg0: i32) -> (i32, i32, i32) {
    %c0_i32 = arith.constant 0 : i32
    %c0_i32_0 = arith.constant 0 : i32
    %c0_i32_1 = arith.constant 0 : i32
    %c0_i32_2 = arith.constant 0 : i32
    return %c0_i32, %c0_i32_0, %c0_i32_1 : i32, i32, i32
  }
}

</mosaic_0001>

<llo_original>
// kernel: _encoder_run.1
$region0: #{_encoder_run.1}
  #allocation0 [shape = 'u32[]', space=smem, size = 0x4, offset = 0x4, fixed_abs, tag = 'smem constant byte address 0x4 - core index']
  #allocation1 [shape = 'u32[144,128]{1,0:T(1,128)}', space=vmem, size = 0x12000, scoped, tag = 'internal scratch']
  %s0 = inlined_call_operand.vmem [shape: f32[1,1,384], index: 0, kind: input, shape index: {}]
  %s1 = inlined_call_operand.vmem [shape: f32[2,1,128], index: 1, kind: input, shape index: {}]
  %s2 = inlined_call_operand.hbm [shape: f32[2,128,384], index: 2, kind: input, shape index: {}]
  %s3 = inlined_call_operand.hbm [shape: f32[2,128,384], index: 3, kind: input, shape index: {}]
  %s4 = inlined_call_operand.vmem [shape: f32[2,1,384], index: 4, kind: input, shape index: {}]
  %s5 = inlined_call_operand.vmem [shape: f32[2,1,128], index: 5, kind: input, shape index: {}]
  %s6 = inlined_call_operand.vmem [shape: f32[1,1,128], index: 6, kind: output, shape index: {0}]
  %s7 = inlined_call_operand.hbm [shape: f32[2,1,128], index: 7, kind: output, shape index: {1}]
  %8 = xla_tuple %s6, %s7
  %s9 = sld [smem:[#allocation0]]
  $region50: #{_encoder_run.1} parent=0
    _
  %s11 = ssub.s32 1, %s9
  %s12 = scalar_select 0, %s11, %s9
  $region1: #{_encoder_run.1} parent=0
    #allocation2 [shape = 'u8[393216]{0}', space=vmem, size = 0x60000, scoped, tag = 'input window, operand 2, single buffered']
    #allocation3 [shape = 's32[1]{0}', space=sflag, size = 0x4, scoped, tag = 'scoped memory for _encoder_run.1']
    #allocation4 [shape = 's32[1]{0}', space=sflag, size = 0x4, scoped, tag = 'scoped memory for _encoder_run.1']
    #allocation5 [shape = 'u8[393216]{0}', space=vmem, size = 0x60000, scoped, tag = 'input window, operand 3, single buffered']
    #allocation6 [shape = 's32[1]{0}', space=sflag, size = 0x4, scoped, tag = 'scoped memory for _encoder_run.1']
    #allocation7 [shape = 'u8[1024]{0}', space=vmem, size = 0x400, scoped, tag = 'output window, operand 1, single buffered']
    %13 = vsyncpa [#allocation3], 0
    %14 = vsyncpa [#allocation6], 0
    %15 = vsyncpa [#allocation4], 0
    // Predicated region
    $region2: #{_encoder_run.1} parent=1 // pred_check
      _
    $region3: #{_encoder_run.1} parent=1 // pred_check_branch
      %17 = sbr.rel (0) target = $region5
    $region4: #{_encoder_run.1} parent=1 // pred_region
      _
    $region5: #{_encoder_run.1} parent=1 // pred_fallthru
      _
    // Predicated region
    $region6: #{_encoder_run.1} parent=1 // pred_check
      _
    $region7: #{_encoder_run.1} parent=1 // pred_check_branch
      %19 = sbr.rel (0) target = $region9
    $region8: #{_encoder_run.1} parent=1 // pred_region
      _
    $region9: #{_encoder_run.1} parent=1 // pred_fallthru
      _
    // Predicated region
    $region10: #{_encoder_run.1} parent=1 // pred_check
      _
    $region11: #{_encoder_run.1} parent=1 // pred_check_branch
      %21 = sbr.rel (0) target = $region13
    $region12: #{_encoder_run.1} parent=1 // pred_region
      %s23 = ssub.s32 12288, 12288
      %24 = vsyncadd [#allocation3], %s23
      %s25 = sshll.u32 [#allocation2], 4
      %s26 = int_to_ptr.vmem [resolvable:$true] %s25
      %31 = dma.hbm_to_vmem [thread:$0]  %s2, 12288, %s26, [#allocation3], 384, 384, 24
    $region13: #{_encoder_run.1} parent=1 // pred_fallthru
      _
    // Predicated region
    $region14: #{_encoder_run.1} parent=1 // pred_check
      _
    $region15: #{_encoder_run.1} parent=1 // pred_check_branch
      %33 = sbr.rel (0) target = $region17
    $region16: #{_encoder_run.1} parent=1 // pred_region
      %s35 = ssub.s32 12288, 12288
      %36 = vsyncadd [#allocation6], %s35
      %s37 = sshll.u32 [#allocation5], 4
      %s38 = int_to_ptr.vmem [resolvable:$true] %s37
      %43 = dma.hbm_to_vmem [thread:$0]  %s3, 12288, %s38, [#allocation6], 384, 384, 24
    $region17: #{_encoder_run.1} parent=1 // pred_fallthru
      _
    // Predicated region
    $region18: #{_encoder_run.1} parent=1 // pred_check
      _
    $region19: #{_encoder_run.1} parent=1 // pred_check_branch
      %45 = sbr.rel (0) target = $region21
    $region20: #{_encoder_run.1} parent=1 // pred_region
      _
    $region21: #{_encoder_run.1} parent=1 // pred_fallthru
      _
    // Predicated region
    $region22: #{_encoder_run.1} parent=1 // pred_check
      _
    $region23: #{_encoder_run.1} parent=1 // pred_check_branch
      %47 = sbr.rel (0) target = $region25
    $region24: #{_encoder_run.1} parent=1 // pred_region
      _
    $region25: #{_encoder_run.1} parent=1 // pred_fallthru
      _
    // Predicated region
    $region26: #{_encoder_run.1} parent=1 // pred_check
      _
    $region27: #{_encoder_run.1} parent=1 // pred_check_branch
      %49 = sbr.rel (0) target = $region29
    $region28: #{_encoder_run.1} parent=1 // pred_region
      %50 = dma.done [#allocation3], 12288
    $region29: #{_encoder_run.1} parent=1 // pred_fallthru
      _
    // Predicated region
    $region30: #{_encoder_run.1} parent=1 // pred_check
      _
    $region31: #{_encoder_run.1} parent=1 // pred_check_branch
      %52 = sbr.rel (0) target = $region33
    $region32: #{_encoder_run.1} parent=1 // pred_region
      %53 = dma.done [#allocation6], 12288
    $region33: #{_encoder_run.1} parent=1 // pred_fallthru
      _
    %v54 = vld [vmem:[%s1] sm:$0x1]
    %v55 = vld [vmem:[%s1 + $0x1] sm:$0x1]
    %56 = vst [vmem:[#allocation7] sm:$0x1] %v54
    %57 = vst [vmem:[#allocation7 + $0x1] sm:$0x1] %v55
    %v58 = vld [vmem:[%s0] sm:$0x7]
    %v59 = vld [vmem:[#allocation7] sm:$0x1]
    %v60 = vld [vmem:[#allocation5] sm:$0xff]
    %v61 = vld [vmem:[#allocation5 + $0x8] sm:$0xff]
    %v62 = vld [vmem:[#allocation5 + $0x10] sm:$0xff]
    %v63 = vld [vmem:[#allocation5 + $0x18] sm:$0xff]
    %v64 = vld [vmem:[#allocation5 + $0x20] sm:$0xff]
    %v65 = vld [vmem:[#allocation5 + $0x28] sm:$0xff]
    %v66 = vld [vmem:[#allocation5 + $0x30] sm:$0xff]
    %v67 = vld [vmem:[#allocation5 + $0x38] sm:$0xff]
    %v68 = vld [vmem:[#allocation5 + $0x40] sm:$0xff]
    %v69 = vld [vmem:[#allocation5 + $0x48] sm:$0xff]
    %v70 = vld [vmem:[#allocation5 + $0x50] sm:$0xff]
    %v71 = vld [vmem:[#allocation5 + $0x58] sm:$0xff]
    %v72 = vld [vmem:[#allocation5 + $0x60] sm:$0xff]
    %v73 = vld [vmem:[#allocation5 + $0x68] sm:$0xff]
    %v74 = vld [vmem:[#allocation5 + $0x70] sm:$0xff]
    %v75 = vld [vmem:[#allocation5 + $0x78] sm:$0xff]
    %v76 = vld [vmem:[#allocation5 + $0x80] sm:$0xff]
    %v77 = vld [vmem:[#allocation5 + $0x88] sm:$0xff]
    %v78 = vld [vmem:[#allocation5 + $0x90] sm:$0xff]
    %v79 = vld [vmem:[#allocation5 + $0x98] sm:$0xff]
    %v80 = vld [vmem:[#allocation5 + $0xa0] sm:$0xff]
    %v81 = vld [vmem:[#allocation5 + $0xa8] sm:$0xff]
    %v82 = vld [vmem:[#allocation5 + $0xb0] sm:$0xff]
    %v83 = vld [vmem:[#allocation5 + $0xb8] sm:$0xff]
    %v84 = vld [vmem:[#allocation5 + $0xc0] sm:$0xff]
    %v85 = vld [vmem:[#allocation5 + $0xc8] sm:$0xff]
    %v86 = vld [vmem:[#allocation5 + $0xd0] sm:$0xff]
    %v87 = vld [vmem:[#allocation5 + $0xd8] sm:$0xff]
    %v88 = vld [vmem:[#allocation5 + $0xe0] sm:$0xff]
    %v89 = vld [vmem:[#allocation5 + $0xe8] sm:$0xff]
    %v90 = vld [vmem:[#allocation5 + $0xf0] sm:$0xff]
    %v91 = vld [vmem:[#allocation5 + $0xf8] sm:$0xff]
    %v92 = vld [vmem:[#allocation5 + $0x100] sm:$0xff]
    %v93 = vld [vmem:[#allocation5 + $0x108] sm:$0xff]
    %v94 = vld [vmem:[#allocation5 + $0x110] sm:$0xff]
    %v95 = vld [vmem:[#allocation5 + $0x118] sm:$0xff]
    %v96 = vld [vmem:[#allocation5 + $0x120] sm:$0xff]
    %v97 = vld [vmem:[#allocation5 + $0x128] sm:$0xff]
    %v98 = vld [vmem:[#allocation5 + $0x130] sm:$0xff]
    %v99 = vld [vmem:[#allocation5 + $0x138] sm:$0xff]
    %v100 = vld [vmem:[#allocation5 + $0x140] sm:$0xff]
    %v101 = vld [vmem:[#allocation5 + $0x148] sm:$0xff]
    %v102 = vld [vmem:[#allocation5 + $0x150] sm:$0xff]
    %v103 = vld [vmem:[#allocation5 + $0x158] sm:$0xff]
    %v104 = vld [vmem:[#allocation5 + $0x160] sm:$0xff]
    %v105 = vld [vmem:[#allocation5 + $0x168] sm:$0xff]
    %v106 = vld [vmem:[#allocation5 + $0x170] sm:$0xff]
    %v107 = vld [vmem:[#allocation5 + $0x178] sm:$0xff]
    %108 = vmatprep.subr.mxu0 %v61
    %109 = vmatpush1.msra.mxu0 %v60
    %110 = vmatprep.subr.mxu0 %v64
    %111 = vmatpush1.msra.mxu0 %v63
    %112 = vmatprep.subr.mxu0 %v67
    %113 = vmatpush1.msra.mxu0 %v66
    %114 = vmatprep.subr.mxu0 %v70
    %115 = vmatpush1.msra.mxu0 %v69
    %116 = vmatprep.subr.mxu0 %v73
    %117 = vmatpush1.msra.mxu0 %v72
    %118 = vmatprep.subr.mxu0 %v76
    %119 = vmatpush1.msra.mxu0 %v75
    %120 = vmatprep.subr.mxu0 %v79
    %121 = vmatpush1.msra.mxu0 %v78
    %122 = vmatprep.subr.mxu0 %v82
    %123 = vmatpush1.msra.mxu0 %v81
    %124 = vmatprep.subr.mxu0 %v85
    %125 = vmatpush1.msra.mxu0 %v84
    %126 = vmatprep.subr.mxu0 %v88
    %127 = vmatpush1.msra.mxu0 %v87
    %128 = vmatprep.subr.mxu0 %v91
    %129 = vmatpush1.msra.mxu0 %v90
    %130 = vmatprep.subr.mxu0 %v94
    %131 = vmatpush1.msra.mxu0 %v93
    %132 = vmatprep.subr.mxu0 %v97
    %133 = vmatpush1.msra.mxu0 %v96
    %134 = vmatprep.subr.mxu0 %v100
    %135 = vmatpush1.msra.mxu0 %v99
    %136 = vmatprep.subr.mxu0 %v103
    %137 = vmatpush1.msra.mxu0 %v102
    %138 = vmatprep.subr.mxu0 %v106
    %139 = vmatpush1.msra.mxu0 %v105
    %140 = vmatprep.subr.mxu0 0.0
    %141 = vmatpush1.msra.mxu0 0.0
    %142 = vmatprep.subr.mxu0 0.0
    %143 = vmatpush1.msra.mxu0 0.0
    %144 = vmatprep.subr.mxu0 0.0
    %145 = vmatpush1.msra.mxu0 0.0
    %146 = vmatprep.subr.mxu0 0.0
    %147 = vmatpush1.msra.mxu0 0.0
    %148 = vmatprep.subr.mxu0 0.0
    %149 = vmatpush1.msra.mxu0 0.0
    %150 = vmatprep.subr.mxu0 0.0
    %151 = vmatpush1.msra.mxu0 0.0
    %152 = vmatprep.subr.mxu0 0.0
    %153 = vmatpush1.msra.mxu0 0.0
    %154 = vmatprep.subr.mxu0 0.0
    %155 = vmatpush1.msra.mxu0 0.0
    %156 = vmatprep.subr.mxu0 0.0
    %157 = vmatpush1.msra.mxu0 0.0
    %158 = vmatprep.subr.mxu0 0.0
    %159 = vmatpush1.msra.mxu0 0.0
    %160 = vmatprep.subr.mxu0 0.0
    %161 = vmatpush1.msra.mxu0 0.0
    %162 = vmatprep.subr.mxu0 0.0
    %163 = vmatpush1.msra.mxu0 0.0
    %164 = vmatprep.subr.mxu0 0.0
    %165 = vmatpush1.msra.mxu0 0.0
    %166 = vmatprep.subr.mxu0 0.0
    %167 = vmatpush1.msra.mxu0 0.0
    %168 = vmatprep.subr.mxu0 0.0
    %169 = vmatpush1.msra.mxu0 0.0
    %170 = vmatprep.subr.mxu0 0.0
    %171 = vmatpush1.msra.mxu0 0.0
    %172 = vmatprep.mubr.f32.mxu0 0.0
    %173 = vmatmul.mubr.f32.gmra.mrb[0].mxu0 %v59
    %v174 = vpop.f32.mrb[0].mxu0
    %v175 = vadd.f32 0.0, %v174
    %v176 = vpop.f32.mrb[0].mxu0
    %v177 = vadd.f32 0.0, %v176
    %178 = vdwg.mxu0
    %179 = vmatprep.subr.mxu0 0.0
    %180 = vmatpush1.msra.mxu0 %v62
    %181 = vmatprep.subr.mxu0 0.0
    %182 = vmatpush1.msra.mxu0 %v65
    %183 = vmatprep.subr.mxu0 0.0
    %184 = vmatpush1.msra.mxu0 %v68
    %185 = vmatprep.subr.mxu0 0.0
    %186 = vmatpush1.msra.mxu0 %v71
    %187 = vmatprep.subr.mxu0 0.0
    %188 = vmatpush1.msra.mxu0 %v74
    %189 = vmatprep.subr.mxu0 0.0
    %190 = vmatpush1.msra.mxu0 %v77
    %191 = vmatprep.subr.mxu0 0.0
    %192 = vmatpush1.msra.mxu0 %v80
    %193 = vmatprep.subr.mxu0 0.0
    %194 = vmatpush1.msra.mxu0 %v83
    %195 = vmatprep.subr.mxu0 0.0
    %196 = vmatpush1.msra.mxu0 %v86
    %197 = vmatprep.subr.mxu0 0.0
    %198 = vmatpush1.msra.mxu0 %v89
    %199 = vmatprep.subr.mxu0 0.0
    %200 = vmatpush1.msra.mxu0 %v92
    %201 = vmatprep.subr.mxu0 0.0
    %202 = vmatpush1.msra.mxu0 %v95
    %203 = vmatprep.subr.mxu0 0.0
    %204 = vmatpush1.msra.mxu0 %v98
    %205 = vmatprep.subr.mxu0 0.0
    %206 = vmatpush1.msra.mxu0 %v101
    %207 = vmatprep.subr.mxu0 0.0
    %208 = vmatpush1.msra.mxu0 %v104
    %209 = vmatprep.subr.mxu0 0.0
    %210 = vmatpush1.msra.mxu0 %v107
    %211 = vmatprep.subr.mxu0 0.0
    %212 = vmatpush1.msra.mxu0 0.0
    %213 = vmatprep.subr.mxu0 0.0
    %214 = vmatpush1.msra.mxu0 0.0
    %215 = vmatprep.subr.mxu0 0.0
    %216 = vmatpush1.msra.mxu0 0.0
    %217 = vmatprep.subr.mxu0 0.0
    %218 = vmatpush1.msra.mxu0 0.0
    %219 = vmatprep.subr.mxu0 0.0
    %220 = vmatpush1.msra.mxu0 0.0
    %221 = vmatprep.subr.mxu0 0.0
    %222 = vmatpush1.msra.mxu0 0.0
    %223 = vmatprep.subr.mxu0 0.0
    %224 = vmatpush1.msra.mxu0 0.0
    %225 = vmatprep.subr.mxu0 0.0
    %226 = vmatpush1.msra.mxu0 0.0
    %227 = vmatprep.subr.mxu0 0.0
    %228 = vmatpush1.msra.mxu0 0.0
    %229 = vmatprep.subr.mxu0 0.0
    %230 = vmatpush1.msra.mxu0 0.0
    %231 = vmatprep.subr.mxu0 0.0
    %232 = vmatpush1.msra.mxu0 0.0
    %233 = vmatprep.subr.mxu0 0.0
    %234 = vmatpush1.msra.mxu0 0.0
    %235 = vmatprep.subr.mxu0 0.0
    %236 = vmatpush1.msra.mxu0 0.0
    %237 = vmatprep.subr.mxu0 0.0
    %238 = vmatpush1.msra.mxu0 0.0
    %239 = vmatprep.subr.mxu0 0.0
    %240 = vmatpush1.msra.mxu0 0.0
    %241 = vmatprep.subr.mxu0 0.0
    %242 = vmatpush1.msra.mxu0 0.0
    %243 = vmatprep.mubr.f32.mxu0 0.0
    %244 = vmatmul.mubr.f32.gmra.mrb[0].mxu0 %v59
    %v245 = vpop.f32.mrb[0].mxu0
    %v246 = vadd.f32 0.0, %v245
    %v247 = vpop.f32.mrb[0].mxu0
    %248 = vdwg.mxu0
    %v249 = vadd.f32 %v58, %v175
    %v250 = vxor.u32 %v249, 2147483648
    %v251 = vmul.f32 %v250, 1.442695
    %v252 = vpow.pop %v251
    %v253 = vadd.f32 %v252, 1.0
    %v254 = vrcp.pop %v253
    %v255 = vmul.f32 1.0, %v254
    %v257 = vrot.slane %v58, 1
    %v259 = vadd.f32 %v257, %v177
    %v260 = vxor.u32 %v259, 2147483648
    %v261 = vmul.f32 %v260, 1.442695
    %v262 = vpow.pop %v261
    %v263 = vadd.f32 %v262, 1.0
    %v264 = vrcp.pop %v263
    %v265 = vmul.f32 1.0, %v264
    %v266 = vld [vmem:[%s5] sm:$0x1]
    %v267 = vadd.f32 %v246, %v266
    %v268 = vmul.f32 %v255, %v267
    %v269 = vrot.slane %v58, 2
    %v271 = vadd.f32 %v269, %v268
    %v272 = vtanh.pop %v271
    %v273 = vsub.f32 1.0, %v265
    %v274 = vmul.f32 %v273, %v272
    %v275 = vmul.f32 %v265, %v59
    %v276 = vadd.f32 %v274, %v275
    %277 = vst [vmem:[#allocation7] sm:$0x1] %v276
    %s278 = scalar_lea.vmem [#allocation7], 1
    %v279 = vld [vmem:[%s278] sm:$0x1]
    %s280 = scalar_lea.vmem [#allocation2], 384
    %v281 = vld [vmem:[%s280] sm:$0xff]
    %v282 = vld [vmem:[%s280 + $0x8] sm:$0xff]
    %v283 = vld [vmem:[%s280 + $0x10] sm:$0xff]
    %v284 = vld [vmem:[%s280 + $0x18] sm:$0xff]
    %v285 = vld [vmem:[%s280 + $0x20] sm:$0xff]
    %v286 = vld [vmem:[%s280 + $0x28] sm:$0xff]
    %v287 = vld [vmem:[%s280 + $0x30] sm:$0xff]
    %v288 = vld [vmem:[%s280 + $0x38] sm:$0xff]
    %v289 = vld [vmem:[%s280 + $0x40] sm:$0xff]
    %v290 = vld [vmem:[%s280 + $0x48] sm:$0xff]
    %v291 = vld [vmem:[%s280 + $0x50] sm:$0xff]
    %v292 = vld [vmem:[%s280 + $0x58] sm:$0xff]
    %v293 = vld [vmem:[%s280 + $0x60] sm:$0xff]
    %v294 = vld [vmem:[%s280 + $0x68] sm:$0xff]
    %v295 = vld [vmem:[%s280 + $0x70] sm:$0xff]
    %v296 = vld [vmem:[%s280 + $0x78] sm:$0xff]
    %v297 = vld [vmem:[%s280 + $0x80] sm:$0xff]
    %v298 = vld [vmem:[%s280 + $0x88] sm:$0xff]
    %v299 = vld [vmem:[%s280 + $0x90] sm:$0xff]
    %v300 = vld [vmem:[%s280 + $0x98] sm:$0xff]
    %v301 = vld [vmem:[%s280 + $0xa0] sm:$0xff]
    %v302 = vld [vmem:[%s280 + $0xa8] sm:$0xff]
    %v303 = vld [vmem:[%s280 + $0xb0] sm:$0xff]
    %v304 = vld [vmem:[%s280 + $0xb8] sm:$0xff]
    %v305 = vld [vmem:[%s280 + $0xc0] sm:$0xff]
    %v306 = vld [vmem:[%s280 + $0xc8] sm:$0xff]
    %v307 = vld [vmem:[%s280 + $0xd0] sm:$0xff]
    %v308 = vld [vmem:[%s280 + $0xd8] sm:$0xff]
    %v309 = vld [vmem:[%s280 + $0xe0] sm:$0xff]
    %v310 = vld [vmem:[%s280 + $0xe8] sm:$0xff]
    %v311 = vld [vmem:[%s280 + $0xf0] sm:$0xff]
    %v312 = vld [vmem:[%s280 + $0xf8] sm:$0xff]
    %v313 = vld [vmem:[%s280 + $0x100] sm:$0xff]
    %v314 = vld [vmem:[%s280 + $0x108] sm:$0xff]
    %v315 = vld [vmem:[%s280 + $0x110] sm:$0xff]
    %v316 = vld [vmem:[%s280 + $0x118] sm:$0xff]
    %v317 = vld [vmem:[%s280 + $0x120] sm:$0xff]
    %v318 = vld [vmem:[%s280 + $0x128] sm:$0xff]
    %v319 = vld [vmem:[%s280 + $0x130] sm:$0xff]
    %v320 = vld [vmem:[%s280 + $0x138] sm:$0xff]
    %v321 = vld [vmem:[%s280 + $0x140] sm:$0xff]
    %v322 = vld [vmem:[%s280 + $0x148] sm:$0xff]
    %v323 = vld [vmem:[%s280 + $0x150] sm:$0xff]
    %v324 = vld [vmem:[%s280 + $0x158] sm:$0xff]
    %v325 = vld [vmem:[%s280 + $0x160] sm:$0xff]
    %v326 = vld [vmem:[%s280 + $0x168] sm:$0xff]
    %v327 = vld [vmem:[%s280 + $0x170] sm:$0xff]
    %v328 = vld [vmem:[%s280 + $0x178] sm:$0xff]
    %s329 = scalar_lea.vmem %s4, 3
    %v330 = vld [vmem:[%s329] sm:$0x7]
    %v332 = vlaneseq
    %v333 = vshrl.u32 %v332, 7
    %v334 = vsub.s32 0, %v333
    %v335 = vrot.slane %v330, %v334
    %v336 = vlaneseq
    %v337 = vshrl.u32 %v336, 7
    %v338 = vsub.s32 1, %v337
    %v339 = vrot.slane %v330, %v338
    %v340 = vlaneseq
    %v341 = vshrl.u32 %v340, 7
    %v342 = vsub.s32 2, %v341
    %v343 = vrot.slane %v330, %v342
    %347 = vmatprep.subr.mxu0 %v282
    %348 = vmatpush1.msra.mxu0 %v281
    %349 = vmatprep.subr.mxu0 %v285
    %350 = vmatpush1.msra.mxu0 %v284
    %351 = vmatprep.subr.mxu0 %v288
    %352 = vmatpush1.msra.mxu0 %v287
    %353 = vmatprep.subr.mxu0 %v291
    %354 = vmatpush1.msra.mxu0 %v290
    %355 = vmatprep.subr.mxu0 %v294
    %356 = vmatpush1.msra.mxu0 %v293
    %357 = vmatprep.subr.mxu0 %v297
    %358 = vmatpush1.msra.mxu0 %v296
    %359 = vmatprep.subr.mxu0 %v300
    %360 = vmatpush1.msra.mxu0 %v299
    %361 = vmatprep.subr.mxu0 %v303
    %362 = vmatpush1.msra.mxu0 %v302
    %363 = vmatprep.subr.mxu0 %v306
    %364 = vmatpush1.msra.mxu0 %v305
    %365 = vmatprep.subr.mxu0 %v309
    %366 = vmatpush1.msra.mxu0 %v308
    %367 = vmatprep.subr.mxu0 %v312
    %368 = vmatpush1.msra.mxu0 %v311
    %369 = vmatprep.subr.mxu0 %v315
    %370 = vmatpush1.msra.mxu0 %v314
    %371 = vmatprep.subr.mxu0 %v318
    %372 = vmatpush1.msra.mxu0 %v317
    %373 = vmatprep.subr.mxu0 %v321
    %374 = vmatpush1.msra.mxu0 %v320
    %375 = vmatprep.subr.mxu0 %v324
    %376 = vmatpush1.msra.mxu0 %v323
    %377 = vmatprep.subr.mxu0 %v327
    %378 = vmatpush1.msra.mxu0 %v326
    %379 = vmatprep.subr.mxu0 0.0
    %380 = vmatpush1.msra.mxu0 0.0
    %381 = vmatprep.subr.mxu0 0.0
    %382 = vmatpush1.msra.mxu0 0.0
    %383 = vmatprep.subr.mxu0 0.0
    %384 = vmatpush1.msra.mxu0 0.0
    %385 = vmatprep.subr.mxu0 0.0
    %386 = vmatpush1.msra.mxu0 0.0
    %387 = vmatprep.subr.mxu0 0.0
    %388 = vmatpush1.msra.mxu0 0.0
    %389 = vmatprep.subr.mxu0 0.0
    %390 = vmatpush1.msra.mxu0 0.0
    %391 = vmatprep.subr.mxu0 0.0
    %392 = vmatpush1.msra.mxu0 0.0
    %393 = vmatprep.subr.mxu0 0.0
    %394 = vmatpush1.msra.mxu0 0.0
    %395 = vmatprep.subr.mxu0 0.0
    %396 = vmatpush1.msra.mxu0 0.0
    %397 = vmatprep.subr.mxu0 0.0
    %398 = vmatpush1.msra.mxu0 0.0
    %399 = vmatprep.subr.mxu0 0.0
    %400 = vmatpush1.msra.mxu0 0.0
    %401 = vmatprep.subr.mxu0 0.0
    %402 = vmatpush1.msra.mxu0 0.0
    %403 = vmatprep.subr.mxu0 0.0
    %404 = vmatpush1.msra.mxu0 0.0
    %405 = vmatprep.subr.mxu0 0.0
    %406 = vmatpush1.msra.mxu0 0.0
    %407 = vmatprep.subr.mxu0 0.0
    %408 = vmatpush1.msra.mxu0 0.0
    %409 = vmatprep.subr.mxu0 0.0
    %410 = vmatpush1.msra.mxu0 0.0
    %411 = vmatprep.mubr.f32.mxu0 0.0
    %412 = vmatmul.mubr.f32.gmra.mrb[0].mxu0 %v276
    %v413 = vpop.f32.mrb[0].mxu0
    %v414 = vadd.f32 %v335, %v413
    %v415 = vpop.f32.mrb[0].mxu0
    %v416 = vadd.f32 %v339, %v415
    %417 = vdwg.mxu0
    %418 = vmatprep.subr.mxu0 0.0
    %419 = vmatpush1.msra.mxu0 %v283
    %420 = vmatprep.subr.mxu0 0.0
    %421 = vmatpush1.msra.mxu0 %v286
    %422 = vmatprep.subr.mxu0 0.0
    %423 = vmatpush1.msra.mxu0 %v289
    %424 = vmatprep.subr.mxu0 0.0
    %425 = vmatpush1.msra.mxu0 %v292
    %426 = vmatprep.subr.mxu0 0.0
    %427 = vmatpush1.msra.mxu0 %v295
    %428 = vmatprep.subr.mxu0 0.0
    %429 = vmatpush1.msra.mxu0 %v298
    %430 = vmatprep.subr.mxu0 0.0
    %431 = vmatpush1.msra.mxu0 %v301
    %432 = vmatprep.subr.mxu0 0.0
    %433 = vmatpush1.msra.mxu0 %v304
    %434 = vmatprep.subr.mxu0 0.0
    %435 = vmatpush1.msra.mxu0 %v307
    %436 = vmatprep.subr.mxu0 0.0
    %437 = vmatpush1.msra.mxu0 %v310
    %438 = vmatprep.subr.mxu0 0.0
    %439 = vmatpush1.msra.mxu0 %v313
    %440 = vmatprep.subr.mxu0 0.0
    %441 = vmatpush1.msra.mxu0 %v316
    %442 = vmatprep.subr.mxu0 0.0
    %443 = vmatpush1.msra.mxu0 %v319
    %444 = vmatprep.subr.mxu0 0.0
    %445 = vmatpush1.msra.mxu0 %v322
    %446 = vmatprep.subr.mxu0 0.0
    %447 = vmatpush1.msra.mxu0 %v325
    %448 = vmatprep.subr.mxu0 0.0
    %449 = vmatpush1.msra.mxu0 %v328
    %450 = vmatprep.subr.mxu0 0.0
    %451 = vmatpush1.msra.mxu0 0.0
    %452 = vmatprep.subr.mxu0 0.0
    %453 = vmatpush1.msra.mxu0 0.0
    %454 = vmatprep.subr.mxu0 0.0
    %455 = vmatpush1.msra.mxu0 0.0
    %456 = vmatprep.subr.mxu0 0.0
    %457 = vmatpush1.msra.mxu0 0.0
    %458 = vmatprep.subr.mxu0 0.0
    %459 = vmatpush1.msra.mxu0 0.0
    %460 = vmatprep.subr.mxu0 0.0
    %461 = vmatpush1.msra.mxu0 0.0
    %462 = vmatprep.subr.mxu0 0.0
    %463 = vmatpush1.msra.mxu0 0.0
    %464 = vmatprep.subr.mxu0 0.0
    %465 = vmatpush1.msra.mxu0 0.0
    %466 = vmatprep.subr.mxu0 0.0
    %467 = vmatpush1.msra.mxu0 0.0
    %468 = vmatprep.subr.mxu0 0.0
    %469 = vmatpush1.msra.mxu0 0.0
    %470 = vmatprep.subr.mxu0 0.0
    %471 = vmatpush1.msra.mxu0 0.0
    %472 = vmatprep.subr.mxu0 0.0
    %473 = vmatpush1.msra.mxu0 0.0
    %474 = vmatprep.subr.mxu0 0.0
    %475 = vmatpush1.msra.mxu0 0.0
    %476 = vmatprep.subr.mxu0 0.0
    %477 = vmatpush1.msra.mxu0 0.0
    %478 = vmatprep.subr.mxu0 0.0
    %479 = vmatpush1.msra.mxu0 0.0
    %480 = vmatprep.subr.mxu0 0.0
    %481 = vmatpush1.msra.mxu0 0.0
    %482 = vmatprep.mubr.f32.mxu0 0.0
    %483 = vmatmul.mubr.f32.gmra.mrb[0].mxu0 %v276
    %v484 = vpop.f32.mrb[0].mxu0
    %v485 = vadd.f32 %v343, %v484
    %v486 = vpop.f32.mrb[0].mxu0
    %487 = vdwg.mxu0
    %s488 = scalar_lea.vmem [#allocation5], 384
    %v489 = vld [vmem:[%s488] sm:$0xff]
    %v490 = vld [vmem:[%s488 + $0x8] sm:$0xff]
    %v491 = vld [vmem:[%s488 + $0x10] sm:$0xff]
    %v492 = vld [vmem:[%s488 + $0x18] sm:$0xff]
    %v493 = vld [vmem:[%s488 + $0x20] sm:$0xff]
    %v494 = vld [vmem:[%s488 + $0x28] sm:$0xff]
    %v495 = vld [vmem:[%s488 + $0x30] sm:$0xff]
    %v496 = vld [vmem:[%s488 + $0x38] sm:$0xff]
    %v497 = vld [vmem:[%s488 + $0x40] sm:$0xff]
    %v498 = vld [vmem:[%s488 + $0x48] sm:$0xff]
    %v499 = vld [vmem:[%s488 + $0x50] sm:$0xff]
    %v500 = vld [vmem:[%s488 + $0x58] sm:$0xff]
    %v501 = vld [vmem:[%s488 + $0x60] sm:$0xff]
    %v502 = vld [vmem:[%s488 + $0x68] sm:$0xff]
    %v503 = vld [vmem:[%s488 + $0x70] sm:$0xff]
    %v504 = vld [vmem:[%s488 + $0x78] sm:$0xff]
    %v505 = vld [vmem:[%s488 + $0x80] sm:$0xff]
    %v506 = vld [vmem:[%s488 + $0x88] sm:$0xff]
    %v507 = vld [vmem:[%s488 + $0x90] sm:$0xff]
    %v508 = vld [vmem:[%s488 + $0x98] sm:$0xff]
    %v509 = vld [vmem:[%s488 + $0xa0] sm:$0xff]
    %v510 = vld [vmem:[%s488 + $0xa8] sm:$0xff]
    %v511 = vld [vmem:[%s488 + $0xb0] sm:$0xff]
    %v512 = vld [vmem:[%s488 + $0xb8] sm:$0xff]
    %v513 = vld [vmem:[%s488 + $0xc0] sm:$0xff]
    %v514 = vld [vmem:[%s488 + $0xc8] sm:$0xff]
    %v515 = vld [vmem:[%s488 + $0xd0] sm:$0xff]
    %v516 = vld [vmem:[%s488 + $0xd8] sm:$0xff]
    %v517 = vld [vmem:[%s488 + $0xe0] sm:$0xff]
    %v518 = vld [vmem:[%s488 + $0xe8] sm:$0xff]
    %v519 = vld [vmem:[%s488 + $0xf0] sm:$0xff]
    %v520 = vld [vmem:[%s488 + $0xf8] sm:$0xff]
    %v521 = vld [vmem:[%s488 + $0x100] sm:$0xff]
    %v522 = vld [vmem:[%s488 + $0x108] sm:$0xff]
    %v523 = vld [vmem:[%s488 + $0x110] sm:$0xff]
    %v524 = vld [vmem:[%s488 + $0x118] sm:$0xff]
    %v525 = vld [vmem:[%s488 + $0x120] sm:$0xff]
    %v526 = vld [vmem:[%s488 + $0x128] sm:$0xff]
    %v527 = vld [vmem:[%s488 + $0x130] sm:$0xff]
    %v528 = vld [vmem:[%s488 + $0x138] sm:$0xff]
    %v529 = vld [vmem:[%s488 + $0x140] sm:$0xff]
    %v530 = vld [vmem:[%s488 + $0x148] sm:$0xff]
    %v531 = vld [vmem:[%s488 + $0x150] sm:$0xff]
    %v532 = vld [vmem:[%s488 + $0x158] sm:$0xff]
    %v533 = vld [vmem:[%s488 + $0x160] sm:$0xff]
    %v534 = vld [vmem:[%s488 + $0x168] sm:$0xff]
    %v535 = vld [vmem:[%s488 + $0x170] sm:$0xff]
    %v536 = vld [vmem:[%s488 + $0x178] sm:$0xff]
    %537 = vmatprep.subr.mxu0 %v490
    %538 = vmatpush1.msra.mxu0 %v489
    %539 = vmatprep.subr.mxu0 %v493
    %540 = vmatpush1.msra.mxu0 %v492
    %541 = vmatprep.subr.mxu0 %v496
    %542 = vmatpush1.msra.mxu0 %v495
    %543 = vmatprep.subr.mxu0 %v499
    %544 = vmatpush1.msra.mxu0 %v498
    %545 = vmatprep.subr.mxu0 %v502
    %546 = vmatpush1.msra.mxu0 %v501
    %547 = vmatprep.subr.mxu0 %v505
    %548 = vmatpush1.msra.mxu0 %v504
    %549 = vmatprep.subr.mxu0 %v508
    %550 = vmatpush1.msra.mxu0 %v507
    %551 = vmatprep.subr.mxu0 %v511
    %552 = vmatpush1.msra.mxu0 %v510
    %553 = vmatprep.subr.mxu0 %v514
    %554 = vmatpush1.msra.mxu0 %v513
    %555 = vmatprep.subr.mxu0 %v517
    %556 = vmatpush1.msra.mxu0 %v516
    %557 = vmatprep.subr.mxu0 %v520
    %558 = vmatpush1.msra.mxu0 %v519
    %559 = vmatprep.subr.mxu0 %v523
    %560 = vmatpush1.msra.mxu0 %v522
    %561 = vmatprep.subr.mxu0 %v526
    %562 = vmatpush1.msra.mxu0 %v525
    %563 = vmatprep.subr.mxu0 %v529
    %564 = vmatpush1.msra.mxu0 %v528
    %565 = vmatprep.subr.mxu0 %v532
    %566 = vmatpush1.msra.mxu0 %v531
    %567 = vmatprep.subr.mxu0 %v535
    %568 = vmatpush1.msra.mxu0 %v534
    %569 = vmatprep.subr.mxu0 0.0
    %570 = vmatpush1.msra.mxu0 0.0
    %571 = vmatprep.subr.mxu0 0.0
    %572 = vmatpush1.msra.mxu0 0.0
    %573 = vmatprep.subr.mxu0 0.0
    %574 = vmatpush1.msra.mxu0 0.0
    %575 = vmatprep.subr.mxu0 0.0
    %576 = vmatpush1.msra.mxu0 0.0
    %577 = vmatprep.subr.mxu0 0.0
    %578 = vmatpush1.msra.mxu0 0.0
    %579 = vmatprep.subr.mxu0 0.0
    %580 = vmatpush1.msra.mxu0 0.0
    %581 = vmatprep.subr.mxu0 0.0
    %582 = vmatpush1.msra.mxu0 0.0
    %583 = vmatprep.subr.mxu0 0.0
    %584 = vmatpush1.msra.mxu0 0.0
    %585 = vmatprep.subr.mxu0 0.0
    %586 = vmatpush1.msra.mxu0 0.0
    %587 = vmatprep.subr.mxu0 0.0
    %588 = vmatpush1.msra.mxu0 0.0
    %589 = vmatprep.subr.mxu0 0.0
    %590 = vmatpush1.msra.mxu0 0.0
    %591 = vmatprep.subr.mxu0 0.0
    %592 = vmatpush1.msra.mxu0 0.0
    %593 = vmatprep.subr.mxu0 0.0
    %594 = vmatpush1.msra.mxu0 0.0
    %595 = vmatprep.subr.mxu0 0.0
    %596 = vmatpush1.msra.mxu0 0.0
    %597 = vmatprep.subr.mxu0 0.0
    %598 = vmatpush1.msra.mxu0 0.0
    %599 = vmatprep.subr.mxu0 0.0
    %600 = vmatpush1.msra.mxu0 0.0
    %601 = vmatprep.mubr.f32.mxu0 0.0
    %602 = vmatmul.mubr.f32.gmra.mrb[0].mxu0 %v279
    %v603 = vpop.f32.mrb[0].mxu0
    %v604 = vadd.f32 0.0, %v603
    %v605 = vpop.f32.mrb[0].mxu0
    %v606 = vadd.f32 0.0, %v605
    %607 = vdwg.mxu0
    %608 = vmatprep.subr.mxu0 0.0
    %609 = vmatpush1.msra.mxu0 %v491
    %610 = vmatprep.subr.mxu0 0.0
    %611 = vmatpush1.msra.mxu0 %v494
    %612 = vmatprep.subr.mxu0 0.0
    %613 = vmatpush1.msra.mxu0 %v497
    %614 = vmatprep.subr.mxu0 0.0
    %615 = vmatpush1.msra.mxu0 %v500
    %616 = vmatprep.subr.mxu0 0.0
    %617 = vmatpush1.msra.mxu0 %v503
    %618 = vmatprep.subr.mxu0 0.0
    %619 = vmatpush1.msra.mxu0 %v506
    %620 = vmatprep.subr.mxu0 0.0
    %621 = vmatpush1.msra.mxu0 %v509
    %622 = vmatprep.subr.mxu0 0.0
    %623 = vmatpush1.msra.mxu0 %v512
    %624 = vmatprep.subr.mxu0 0.0
    %625 = vmatpush1.msra.mxu0 %v515
    %626 = vmatprep.subr.mxu0 0.0
    %627 = vmatpush1.msra.mxu0 %v518
    %628 = vmatprep.subr.mxu0 0.0
    %629 = vmatpush1.msra.mxu0 %v521
    %630 = vmatprep.subr.mxu0 0.0
    %631 = vmatpush1.msra.mxu0 %v524
    %632 = vmatprep.subr.mxu0 0.0
    %633 = vmatpush1.msra.mxu0 %v527
    %634 = vmatprep.subr.mxu0 0.0
    %635 = vmatpush1.msra.mxu0 %v530
    %636 = vmatprep.subr.mxu0 0.0
    %637 = vmatpush1.msra.mxu0 %v533
    %638 = vmatprep.subr.mxu0 0.0
    %639 = vmatpush1.msra.mxu0 %v536
    %640 = vmatprep.subr.mxu0 0.0
    %641 = vmatpush1.msra.mxu0 0.0
    %642 = vmatprep.subr.mxu0 0.0
    %643 = vmatpush1.msra.mxu0 0.0
    %644 = vmatprep.subr.mxu0 0.0
    %645 = vmatpush1.msra.mxu0 0.0
    %646 = vmatprep.subr.mxu0 0.0
    %647 = vmatpush1.msra.mxu0 0.0
    %648 = vmatprep.subr.mxu0 0.0
    %649 = vmatpush1.msra.mxu0 0.0
    %650 = vmatprep.subr.mxu0 0.0
    %651 = vmatpush1.msra.mxu0 0.0
    %652 = vmatprep.subr.mxu0 0.0
    %653 = vmatpush1.msra.mxu0 0.0
    %654 = vmatprep.subr.mxu0 0.0
    %655 = vmatpush1.msra.mxu0 0.0
    %656 = vmatprep.subr.mxu0 0.0
    %657 = vmatpush1.msra.mxu0 0.0
    %658 = vmatprep.subr.mxu0 0.0
    %659 = vmatpush1.msra.mxu0 0.0
    %660 = vmatprep.subr.mxu0 0.0
    %661 = vmatpush1.msra.mxu0 0.0
    %662 = vmatprep.subr.mxu0 0.0
    %663 = vmatpush1.msra.mxu0 0.0
    %664 = vmatprep.subr.mxu0 0.0
    %665 = vmatpush1.msra.mxu0 0.0
    %666 = vmatprep.subr.mxu0 0.0
    %667 = vmatpush1.msra.mxu0 0.0
    %668 = vmatprep.subr.mxu0 0.0
    %669 = vmatpush1.msra.mxu0 0.0
    %670 = vmatprep.subr.mxu0 0.0
    %671 = vmatpush1.msra.mxu0 0.0
    %672 = vmatprep.mubr.f32.mxu0 0.0
    %673 = vmatmul.mubr.f32.gmra.mrb[0].mxu0 %v279
    %v674 = vpop.f32.mrb[0].mxu0
    %v675 = vadd.f32 0.0, %v674
    %v676 = vpop.f32.mrb[0].mxu0
    %677 = vdwg.mxu0
    %v678 = vadd.f32 %v414, %v604
    %v679 = vxor.u32 %v678, 2147483648
    %v680 = vmul.f32 %v679, 1.442695
    %v681 = vpow.pop %v680
    %v682 = vadd.f32 %v681, 1.0
    %v683 = vrcp.pop %v682
    %v684 = vmul.f32 1.0, %v683
    %v685 = vadd.f32 %v416, %v606
    %v686 = vxor.u32 %v685, 2147483648
    %v687 = vmul.f32 %v686, 1.442695
    %v688 = vpow.pop %v687
    %v689 = vadd.f32 %v688, 1.0
    %v690 = vrcp.pop %v689
    %v691 = vmul.f32 1.0, %v690
    %s692 = scalar_lea.vmem %s5, 1
    %v693 = vld [vmem:[%s692] sm:$0x1]
    %v694 = vadd.f32 %v675, %v693
    %v695 = vmul.f32 %v684, %v694
    %v696 = vadd.f32 %v485, %v695
    %v697 = vtanh.pop %v696
    %v698 = vsub.f32 1.0, %v691
    %v699 = vmul.f32 %v698, %v697
    %v700 = vmul.f32 %v691, %v279
    %v701 = vadd.f32 %v699, %v700
    %702 = vst [vmem:[%s278] sm:$0x1] %v701
    %703 = vst [vmem:[%s6] sm:$0x1] %v701
    // Predicated region
    $region34: #{_encoder_run.1} parent=1 // pred_check
      _
    $region35: #{_encoder_run.1} parent=1 // pred_check_branch
      %705 = sbr.rel (0) target = $region37
    $region36: #{_encoder_run.1} parent=1 // pred_region
      _
    $region37: #{_encoder_run.1} parent=1 // pred_fallthru
      _
    // Predicated region
    $region38: #{_encoder_run.1} parent=1 // pred_check
      _
    $region39: #{_encoder_run.1} parent=1 // pred_check_branch
      %707 = sbr.rel (0) target = $region41
    $region40: #{_encoder_run.1} parent=1 // pred_region
      %s709 = ssub.s32 32, 32
      %710 = vsyncadd [#allocation4], %s709
      %s711 = sshll.u32 [#allocation7], 4
      %s712 = int_to_ptr.vmem [resolvable:$true] %s711
      %717 = dma.vmem_to_hbm [thread:$0]  %s712, 32, %s7, [#allocation4], 16, 16, 1
    $region41: #{_encoder_run.1} parent=1 // pred_fallthru
      _
    // Predicated region
    $region42: #{_encoder_run.1} parent=1 // pred_check
      _
    $region43: #{_encoder_run.1} parent=1 // pred_check_branch
      %719 = sbr.rel (0) target = $region45
    $region44: #{_encoder_run.1} parent=1 // pred_region
      _
    $region45: #{_encoder_run.1} parent=1 // pred_fallthru
      _
    // Predicated region
    $region46: #{_encoder_run.1} parent=1 // pred_check
      _
    $region47: #{_encoder_run.1} parent=1 // pred_check_branch
      %721 = sbr.rel (0) target = $region49
    $region48: #{_encoder_run.1} parent=1 // pred_region
      %722 = dma.done [#allocation4], 32
    $region49: #{_encoder_run.1} parent=1 // pred_fallthru
      _
    %723 = vsyncpa [#allocation3], 1
    %724 = vsyncpa [#allocation6], 1
    %725 = vsyncpa [#allocation4], 1

</llo_original>
